<compile_context>
chip_gen: v7x
topology: tpu7x:2x2x1
jax: 0.10.0
libtpu: 0.0.40
codegen_flags: <defaults>
</compile_context>

<pallas_src>
import jax
import jax.numpy as jnp
from jax import lax
from jax.experimental import pallas as pl
from jax.experimental.pallas import tpu as pltpu

NEG_SLOPE = 0.01      # F.leaky_relu default
LANE = 128
MAX_TILE_B = 1024     # ~3 KiB/row of double-buffered I/O + intermediates:
                      # safe under the default scoped VMEM on v5e/v6e/v7x.


def _leaky_relu(x):
    return jnp.where(x >= 0, x, NEG_SLOPE * x)


def _round_up(n, m):
    return ((n + m - 1) // m) * m


def discretnet_kernel(x_ref, w1_ref, b1_ref, w2_ref, b2_ref, w3_ref, b3_ref,
                      gumbel_ref, slab_ref):
    x = x_ref[...]                                    # (TB, D)

    # TODO(synk): cast matmul operands to bf16 (keep f32 accumulate) once H >= 128.
    # fc1 -> leaky_relu
    h1 = _leaky_relu(
        jnp.dot(x, w1_ref[...], preferred_element_type=jnp.float32) + b1_ref[...])
    # fc2 -> leaky_relu
    h2 = _leaky_relu(
        jnp.dot(h1, w2_ref[...], preferred_element_type=jnp.float32) + b2_ref[...])
    # fc3 (logits)
    out = jnp.dot(h2, w3_ref[...], preferred_element_type=jnp.float32) + b3_ref[...]

    TB, A = out.shape
    SLAB_W = slab_ref.shape[1]

    # log_softmax over dim=1 (numerically stable)
    m = jnp.max(out, axis=1, keepdims=True)
    shifted = out - m
    lse = jnp.log(jnp.sum(jnp.exp(shifted), axis=1, keepdims=True))
    log_probs = shifted - lse                         # (TB, A)

    # categorical sample via gumbel-max on logits (== multinomial(softmax(out)))
    scores = out + gumbel_ref[...]                    # (TB, A)
    smax = jnp.max(scores, axis=1, keepdims=True)

    # One wide iota / one-hot compare; cols [0, A) double as the action
    # one-hot, col A carries log_prob, col A+1 carries sum(out^2).
    col = lax.broadcasted_iota(jnp.int32, (TB, SLAB_W), 1)   # 2-D iota (TPU req.)
    col_a = col[:, :A]                                # static slice, no data movement
    # first (lowest-index) argmax, matching torch argmax tie-breaking
    idx = jnp.min(jnp.where(scores >= smax, col_a, jnp.int32(A)),
                  axis=1, keepdims=True)              # (TB, 1)

    hit = col == idx                                  # (TB, SLAB_W) one-hot mask
    # gather log_probs at the sampled action
    logp = jnp.sum(jnp.where(hit[:, :A], log_probs, 0.0),
                   axis=1, keepdims=True)             # (TB, 1)
    # per-row contribution to (out ** 2).mean()
    rowsq = jnp.sum(out * out, axis=1, keepdims=True)  # (TB, 1)

    # Pack [one-hot | logp | row_sum(out^2) | zeros] -> one lane-dense store.
    packed = hit.astype(jnp.float32)                      # one-hot in cols [0, A)
    packed = jnp.where(col == A, logp, packed)            # col A     : log_prob
    packed = jnp.where(col == A + 1, rowsq, packed)       # col A + 1 : sum(out^2)
    slab_ref[...] = packed


def _select_tile_b(B, tile_b):
    """Pick the batch tile: fewest grid steps, VMEM-safe, v7x-friendly."""
    if tile_b is None:
        if B <= MAX_TILE_B:
            return _round_up(B, 8)                    # grid = (1,)
        # Very large batch: fewest steps with tile_b <= MAX_TILE_B, rounded to
        # an EVEN step count so the "parallel" axis shards across both TCs on
        # v7x (no effect on single-TC v5e/v6e).
        n_steps = pl.cdiv(B, MAX_TILE_B)
        if n_steps % 2:
            n_steps += 1
        return _round_up(pl.cdiv(B, n_steps), 8)
    return max(8, _round_up(min(tile_b, _round_up(B, 8)), 8))


def discretnet_forward(x, params, gumbel, *, tile_b=None):
    """DiscretNet forward (training=True, ret_prob=True, norm_in=False).

    Returns (act_onehot (B, A), log_probs (B, 1), reg scalar)."""
    B, D = x.shape
    H = params["w1"].shape[1]
    A = params["w3"].shape[1]

    tile_b = _select_tile_b(B, tile_b)
    grid = (pl.cdiv(B, tile_b),)          # edge block masked by Pallas; no jnp.pad
    slab_w = max(LANE, _round_up(A + 2, LANE))

    row = lambda i: (i, 0)      # blocked along batch
    const = lambda i: (0, 0)    # weights: same block every step (VMEM-resident)

    cost = pl.CostEstimate(
        flops=2 * B * (D * H + H * H + H * A),
        transcendentals=B * (A + 1),
        bytes_accessed=4 * (B * (D + A + slab_w)
                            + D * H + H * H + H * A + 2 * H + A),
    )

    slab = pl.pallas_call(
        discretnet_kernel,
        out_shape=jax.ShapeDtypeStruct((B, slab_w), jnp.float32),
        grid=grid,
        in_specs=[
            pl.BlockSpec((tile_b, D), row),   # x
            pl.BlockSpec((D, H), const),      # w1
            pl.BlockSpec((1, H), const),      # b1
            pl.BlockSpec((H, H), const),      # w2
            pl.BlockSpec((1, H), const),      # b2
            pl.BlockSpec((H, A), const),      # w3
            pl.BlockSpec((1, A), const),      # b3
            pl.BlockSpec((tile_b, A), row),   # gumbel
        ],
        out_specs=pl.BlockSpec((tile_b, slab_w), row),
        compiler_params=pltpu.CompilerParams(
            dimension_semantics=("parallel",),
            vmem_limit_bytes=32 << 20),
        cost_estimate=cost,
    )(x, params["w1"], params["b1"], params["w2"], params["b2"],
      params["w3"], params["b3"], gumbel)

    # slab has exactly B rows (no padded rows are ever written).
    act = slab[:, :A]
    log_probs = slab[:, A:A + 1]
    reg = jnp.sum(slab[:, A + 1]) / (B * A)
    return act, log_probs, reg


def init_params(key, input_dim, hidden_dim, out_dim):
    """Deterministic init matching nn.Linear shapes (stored transposed: (in, out))."""
    ks = jax.random.split(key, 6)

    def linear(kw, kb, fan_in, fan_out):
        bound = 1.0 / jnp.sqrt(fan_in)
        w = jax.random.uniform(kw, (fan_in, fan_out), jnp.float32, -bound, bound)
        b = jax.random.uniform(kb, (1, fan_out), jnp.float32, -bound, bound)
        return w, b

    w1, b1 = linear(ks[0], ks[1], input_dim, hidden_dim)
    w2, b2 = linear(ks[2], ks[3], hidden_dim, hidden_dim)
    w3, b3 = linear(ks[4], ks[5], hidden_dim, out_dim)
    return {"w1": w1, "b1": b1, "w2": w2, "b2": b2, "w3": w3, "b3": b3}


def ref_forward(x, p, g):
    """Plain-JAX reference of DiscretNet.forward(training=True, ret_prob=True)."""
    h1p = x @ p["w1"] + p["b1"]
    h1 = jnp.where(h1p >= 0, h1p, NEG_SLOPE * h1p)
    h2p = h1 @ p["w2"] + p["b2"]
    h2 = jnp.where(h2p >= 0, h2p, NEG_SLOPE * h2p)
    out = h2 @ p["w3"] + p["b3"]
    lp = jax.nn.log_softmax(out, axis=1)
    idx = jnp.argmax(out + g, axis=1)
    act = jax.nn.one_hot(idx, out.shape[1], dtype=jnp.float32)
    return act, jnp.take_along_axis(lp, idx[:, None], axis=1), jnp.mean(out ** 2)


if __name__ == "__main__":
    # norm_in=False (identity in_fn), onehot_dim=0, nonlin=leaky_relu
    B, INPUT_DIM, HIDDEN_DIM, OUT_DIM = 8, 16, 32, 8

    key = jax.random.PRNGKey(0)
    k_x, k_p, k_g, k_x2, k_g2 = jax.random.split(key, 5)

    x = jax.random.normal(k_x, (B, INPUT_DIM), jnp.float32)
    params = init_params(k_p, INPUT_DIM, HIDDEN_DIM, OUT_DIM)

    # Gumbel noise for categorical sampling (deterministic).
    u = jax.random.uniform(k_g, (B, OUT_DIM), jnp.float32, 1e-6, 1.0 - 1e-6)
    gumbel = -jnp.log(-jnp.log(u))

    # Auto tile: B <= 1024 -> single grid step, no padding.
    act, log_probs, reg = discretnet_forward(x, params, gumbel)
    jax.block_until_ready((act, log_probs, reg))

    r_act, r_lp, r_reg = ref_forward(x, params, gumbel)
    assert jnp.allclose(act, r_act)
    assert jnp.allclose(log_probs, r_lp, atol=1e-5)
    assert jnp.allclose(reg, r_reg, atol=1e-5)

    # Second check: explicit small tile -> multi-step grid with a masked edge
    # block (40 rows, tile 16 -> grid=(3,)).
    B2 = 40
    x2 = jax.random.normal(k_x2, (B2, INPUT_DIM), jnp.float32)
    u2 = jax.random.uniform(k_g2, (B2, OUT_DIM), jnp.float32, 1e-6, 1.0 - 1e-6)
    g2 = -jnp.log(-jnp.log(u2))
    act2, lp2, reg2 = discretnet_forward(x2, params, g2, tile_b=16)
    jax.block_until_ready((act2, lp2, reg2))
    r_act2, r_lp2, r_reg2 = ref_forward(x2, params, g2)
    assert jnp.allclose(act2, r_act2)
    assert jnp.allclose(lp2, r_lp2, atol=1e-5)
    assert jnp.allclose(reg2, r_reg2, atol=1e-5)

    print("KERNEL_OK")
</pallas_src>

<mosaic_0001>
module attributes {stable_mosaic.version = 11 : i64} {
  func.func @discretnet_kernel(%arg0: i32, %arg1: memref<8x16xf32, #tpu.memory_space<vmem>>, %arg2: memref<16x32xf32, #tpu.memory_space<vmem>>, %arg3: memref<1x32xf32, #tpu.memory_space<vmem>>, %arg4: memref<32x32xf32, #tpu.memory_space<vmem>>, %arg5: memref<1x32xf32, #tpu.memory_space<vmem>>, %arg6: memref<32x8xf32, #tpu.memory_space<vmem>>, %arg7: memref<1x8xf32, #tpu.memory_space<vmem>>, %arg8: memref<8x8xf32, #tpu.memory_space<vmem>>, %arg9: memref<8x128xf32, #tpu.memory_space<vmem>>) attributes {dimension_semantics = [#tpu.dimension_semantics<parallel>], iteration_bounds = array<i64: 1>, scalar_prefetch = 0 : i64, scratch_operands = 0 : i64, tpu.core_type = #tpu.core_type<tc>, window_params = [{transform_indices = @transform_0, window_bounds = array<i64: 8, 16>}, {pipeline_mode = #tpu.pipeline_mode<synchronous>, transform_indices = @transform_1, window_bounds = array<i64: 16, 32>}, {pipeline_mode = #tpu.pipeline_mode<synchronous>, transform_indices = @transform_2, window_bounds = array<i64: 1, 32>}, {pipeline_mode = #tpu.pipeline_mode<synchronous>, transform_indices = @transform_3, window_bounds = array<i64: 32, 32>}, {pipeline_mode = #tpu.pipeline_mode<synchronous>, transform_indices = @transform_4, window_bounds = array<i64: 1, 32>}, {pipeline_mode = #tpu.pipeline_mode<synchronous>, transform_indices = @transform_5, window_bounds = array<i64: 32, 8>}, {pipeline_mode = #tpu.pipeline_mode<synchronous>, transform_indices = @transform_6, window_bounds = array<i64: 1, 8>}, {transform_indices = @transform_7, window_bounds = array<i64: 8, 8>}, {transform_indices = @transform_8, window_bounds = array<i64: 8, 128>}]} {
    %c0 = arith.constant 0 : index
    %c0_0 = arith.constant 0 : index
    %0 = vector.load %arg1[%c0, %c0_0] : memref<8x16xf32, #tpu.memory_space<vmem>>, vector<8x16xf32>
    %c0_1 = arith.constant 0 : index
    %c0_2 = arith.constant 0 : index
    %1 = vector.load %arg2[%c0_1, %c0_2] : memref<16x32xf32, #tpu.memory_space<vmem>>, vector<16x32xf32>
    %cst = arith.constant dense<0.000000e+00> : vector<8x32xf32>
    %2 = tpu.matmul %0, %1, %cst {dimension_numbers = #tpu.dot_dimension_numbers<[1], [0], [0], [1], [0, 0, 1, 1], [], []>} : vector<8x16xf32>, vector<16x32xf32>, vector<8x32xf32> -> vector<8x32xf32>
    %c0_3 = arith.constant 0 : index
    %c0_4 = arith.constant 0 : index
    %3 = vector.load %arg3[%c0_3, %c0_4] : memref<1x32xf32, #tpu.memory_space<vmem>>, vector<1x32xf32>
    %4 = vector.broadcast %3 : vector<1x32xf32> to vector<8x32xf32>
    %5 = arith.addf %2, %4 : vector<8x32xf32>
    %cst_5 = arith.constant 0.000000e+00 : f32
    %6 = vector.broadcast %cst_5 : f32 to vector<8x32xf32>
    %7 = arith.cmpf oge, %5, %6 : vector<8x32xf32>
    %cst_6 = arith.constant 0.00999999977 : f32
    %8 = vector.broadcast %cst_6 : f32 to vector<8x32xf32>
    %9 = arith.mulf %8, %5 : vector<8x32xf32>
    %10 = arith.select %7, %5, %9 : vector<8x32xi1>, vector<8x32xf32>
    %c0_7 = arith.constant 0 : index
    %c0_8 = arith.constant 0 : index
    %11 = vector.load %arg4[%c0_7, %c0_8] : memref<32x32xf32, #tpu.memory_space<vmem>>, vector<32x32xf32>
    %cst_9 = arith.constant dense<0.000000e+00> : vector<8x32xf32>
    %12 = tpu.matmul %10, %11, %cst_9 {dimension_numbers = #tpu.dot_dimension_numbers<[1], [0], [0], [1], [0, 0, 1, 1], [], []>} : vector<8x32xf32>, vector<32x32xf32>, vector<8x32xf32> -> vector<8x32xf32>
    %c0_10 = arith.constant 0 : index
    %c0_11 = arith.constant 0 : index
    %13 = vector.load %arg5[%c0_10, %c0_11] : memref<1x32xf32, #tpu.memory_space<vmem>>, vector<1x32xf32>
    %14 = vector.broadcast %13 : vector<1x32xf32> to vector<8x32xf32>
    %15 = arith.addf %12, %14 : vector<8x32xf32>
    %cst_12 = arith.constant 0.000000e+00 : f32
    %16 = vector.broadcast %cst_12 : f32 to vector<8x32xf32>
    %17 = arith.cmpf oge, %15, %16 : vector<8x32xf32>
    %cst_13 = arith.constant 0.00999999977 : f32
    %18 = vector.broadcast %cst_13 : f32 to vector<8x32xf32>
    %19 = arith.mulf %18, %15 : vector<8x32xf32>
    %20 = arith.select %17, %15, %19 : vector<8x32xi1>, vector<8x32xf32>
    %c0_14 = arith.constant 0 : index
    %c0_15 = arith.constant 0 : index
    %21 = vector.load %arg6[%c0_14, %c0_15] : memref<32x8xf32, #tpu.memory_space<vmem>>, vector<32x8xf32>
    %cst_16 = arith.constant dense<0.000000e+00> : vector<8x8xf32>
    %22 = tpu.matmul %20, %21, %cst_16 {dimension_numbers = #tpu.dot_dimension_numbers<[1], [0], [0], [1], [0, 0, 1, 1], [], []>} : vector<8x32xf32>, vector<32x8xf32>, vector<8x8xf32> -> vector<8x8xf32>
    %c0_17 = arith.constant 0 : index
    %c0_18 = arith.constant 0 : index
    %23 = vector.load %arg7[%c0_17, %c0_18] : memref<1x8xf32, #tpu.memory_space<vmem>>, vector<1x8xf32>
    %24 = vector.broadcast %23 : vector<1x8xf32> to vector<8x8xf32>
    %25 = arith.addf %22, %24 : vector<8x8xf32>
    %cst_19 = arith.constant dense<0xFF800000> : vector<8xf32>
    %26 = vector.multi_reduction <maximumf>, %25, %cst_19 [1] : vector<8x8xf32> to vector<8xf32>
    %27 = vector.shape_cast %26 : vector<8xf32> to vector<8x1xf32>
    %28 = vector.broadcast %27 : vector<8x1xf32> to vector<8x8xf32>
    %29 = arith.subf %25, %28 : vector<8x8xf32>
    %30 = math.exp %29 : vector<8x8xf32>
    %cst_20 = arith.constant dense<0.000000e+00> : vector<8xf32>
    %31 = vector.multi_reduction <add>, %30, %cst_20 [1] : vector<8x8xf32> to vector<8xf32>
    %32 = vector.shape_cast %31 : vector<8xf32> to vector<8x1xf32>
    %33 = math.log %32 : vector<8x1xf32>
    %34 = vector.broadcast %33 : vector<8x1xf32> to vector<8x8xf32>
    %35 = arith.subf %29, %34 : vector<8x8xf32>
    %c0_21 = arith.constant 0 : index
    %c0_22 = arith.constant 0 : index
    %36 = vector.load %arg8[%c0_21, %c0_22] : memref<8x8xf32, #tpu.memory_space<vmem>>, vector<8x8xf32>
    %37 = arith.addf %25, %36 : vector<8x8xf32>
    %cst_23 = arith.constant dense<0xFF800000> : vector<8xf32>
    %38 = vector.multi_reduction <maximumf>, %37, %cst_23 [1] : vector<8x8xf32> to vector<8xf32>
    %39 = vector.shape_cast %38 : vector<8xf32> to vector<8x1xf32>
    %40 = tpu.iota {dimensions = array<i32: 1>} : vector<8x128xi32>
    %41 = vector.extract_strided_slice %40 {offsets = [0, 0], sizes = [8, 8], strides = [1, 1]} : vector<8x128xi32> to vector<8x8xi32>
    %42 = vector.broadcast %39 : vector<8x1xf32> to vector<8x8xf32>
    %43 = arith.cmpf oge, %37, %42 : vector<8x8xf32>
    %c8_i32 = arith.constant 8 : i32
    %44 = vector.broadcast %c8_i32 : i32 to vector<8x8xi32>
    %45 = arith.select %43, %41, %44 : vector<8x8xi1>, vector<8x8xi32>
    %cst_24 = arith.constant dense<2147483647> : vector<8xi32>
    %46 = vector.multi_reduction <minsi>, %45, %cst_24 [1] : vector<8x8xi32> to vector<8xi32>
    %47 = vector.shape_cast %46 : vector<8xi32> to vector<8x1xi32>
    %48 = vector.broadcast %47 : vector<8x1xi32> to vector<8x128xi32>
    %49 = arith.cmpi eq, %40, %48 : vector<8x128xi32>
    %50 = vector.extract_strided_slice %49 {offsets = [0, 0], sizes = [8, 8], strides = [1, 1]} : vector<8x128xi1> to vector<8x8xi1>
    %cst_25 = arith.constant 0.000000e+00 : f32
    %51 = vector.broadcast %cst_25 : f32 to vector<8x8xf32>
    %52 = arith.select %50, %35, %51 : vector<8x8xi1>, vector<8x8xf32>
    %cst_26 = arith.constant dense<0.000000e+00> : vector<8xf32>
    %53 = vector.multi_reduction <add>, %52, %cst_26 [1] : vector<8x8xf32> to vector<8xf32>
    %54 = vector.shape_cast %53 : vector<8xf32> to vector<8x1xf32>
    %55 = arith.mulf %25, %25 : vector<8x8xf32>
    %cst_27 = arith.constant dense<0.000000e+00> : vector<8xf32>
    %56 = vector.multi_reduction <add>, %55, %cst_27 [1] : vector<8x8xf32> to vector<8xf32>
    %57 = vector.shape_cast %56 : vector<8xf32> to vector<8x1xf32>
    %58 = arith.extui %49 : vector<8x128xi1> to vector<8x128xi32>
    %59 = arith.sitofp %58 : vector<8x128xi32> to vector<8x128xf32>
    %c8_i32_28 = arith.constant 8 : i32
    %60 = vector.broadcast %c8_i32_28 : i32 to vector<8x128xi32>
    %61 = arith.cmpi eq, %40, %60 : vector<8x128xi32>
    %62 = vector.shape_cast %54 : vector<8x1xf32> to vector<8x1xf32>
    %63 = vector.broadcast %62 : vector<8x1xf32> to vector<8x128xf32>
    %64 = arith.select %61, %63, %59 : vector<8x128xi1>, vector<8x128xf32>
    %c9_i32 = arith.constant 9 : i32
    %65 = vector.broadcast %c9_i32 : i32 to vector<8x128xi32>
    %66 = arith.cmpi eq, %40, %65 : vector<8x128xi32>
    %67 = vector.shape_cast %57 : vector<8x1xf32> to vector<8x1xf32>
    %68 = vector.broadcast %67 : vector<8x1xf32> to vector<8x128xf32>
    %69 = arith.select %66, %68, %64 : vector<8x128xi1>, vector<8x128xf32>
    %c0_29 = arith.constant 0 : index
    %c0_30 = arith.constant 0 : index
    %70 = vector.load %arg9[%c0_29, %c0_30] : memref<8x128xf32, #tpu.memory_space<vmem>>, vector<8x128xf32>
    tpu.vector_store %arg9[%c0_29, %c0_30], %69 {strides = array<i32>} : memref<8x128xf32, #tpu.memory_space<vmem>>, vector<8x128xf32>,
    return
  }
  func.func @transform_0(%arg0: i32) -> (i32, i32) {
    %c0_i32 = arith.constant 0 : i32
    %c0_i32_0 = arith.constant 0 : i32
    return %arg0, %c0_i32 : i32, i32
  }
  func.func @transform_1(%arg0: i32) -> (i32, i32) {
    %c0_i32 = arith.constant 0 : i32
    %c0_i32_0 = arith.constant 0 : i32
    %c0_i32_1 = arith.constant 0 : i32
    return %c0_i32, %c0_i32_0 : i32, i32
  }
  func.func @transform_2(%arg0: i32) -> (i32, i32) {
    %c0_i32 = arith.constant 0 : i32
    %c0_i32_0 = arith.constant 0 : i32
    %c0_i32_1 = arith.constant 0 : i32
    return %c0_i32, %c0_i32_0 : i32, i32
  }
  func.func @transform_3(%arg0: i32) -> (i32, i32) {
    %c0_i32 = arith.constant 0 : i32
    %c0_i32_0 = arith.constant 0 : i32
    %c0_i32_1 = arith.constant 0 : i32
    return %c0_i32, %c0_i32_0 : i32, i32
  }
  func.func @transform_4(%arg0: i32) -> (i32, i32) {
    %c0_i32 = arith.constant 0 : i32
    %c0_i32_0 = arith.constant 0 : i32
    %c0_i32_1 = arith.constant 0 : i32
    return %c0_i32, %c0_i32_0 : i32, i32
  }
  func.func @transform_5(%arg0: i32) -> (i32, i32) {
    %c0_i32 = arith.constant 0 : i32
    %c0_i32_0 = arith.constant 0 : i32
    %c0_i32_1 = arith.constant 0 : i32
    return %c0_i32, %c0_i32_0 : i32, i32
  }
  func.func @transform_6(%arg0: i32) -> (i32, i32) {
    %c0_i32 = arith.constant 0 : i32
    %c0_i32_0 = arith.constant 0 : i32
    %c0_i32_1 = arith.constant 0 : i32
    return %c0_i32, %c0_i32_0 : i32, i32
  }
  func.func @transform_7(%arg0: i32) -> (i32, i32) {
    %c0_i32 = arith.constant 0 : i32
    %c0_i32_0 = arith.constant 0 : i32
    return %arg0, %c0_i32 : i32, i32
  }
  func.func @transform_8(%arg0: i32) -> (i32, i32) {
    %c0_i32 = arith.constant 0 : i32
    %c0_i32_0 = arith.constant 0 : i32
    return %arg0, %c0_i32 : i32, i32
  }
}

</mosaic_0001>

<llo_original>
// kernel: tpu_custom_call.1
$region0: #{tpu_custom_call.1}
  #allocation0 [shape = 'u32[]', space=smem, size = 0x4, offset = 0x4, fixed_abs, tag = 'smem constant byte address 0x4 - core index']
  #allocation1 [shape = 'u32[144,128]{1,0:T(1,128)}', space=vmem, size = 0x12000, scoped, tag = 'internal scratch']
  %s0 = inlined_call_operand.hbm [shape: f32[8,16], index: 0, kind: input, shape index: {}]
  %s1 = inlined_call_operand.vmem [shape: f32[16,32], index: 1, kind: input, shape index: {}]
  %s2 = inlined_call_operand.vmem [shape: f32[1,32], index: 2, kind: input, shape index: {}]
  %s3 = inlined_call_operand.vmem [shape: f32[32,32], index: 3, kind: input, shape index: {}]
  %s4 = inlined_call_operand.vmem [shape: f32[1,32], index: 4, kind: input, shape index: {}]
  %s5 = inlined_call_operand.vmem [shape: f32[32,8], index: 5, kind: input, shape index: {}]
  %s6 = inlined_call_operand.hbm [shape: f32[1,8], index: 6, kind: input, shape index: {}]
  %s7 = inlined_call_operand.vmem [shape: f32[8,8], index: 7, kind: input, shape index: {}]
  %s8 = inlined_call_operand.hbm [shape: f32[8,128], index: 8, kind: output, shape index: {}]
  %s9 = sld [smem:[#allocation0]]
  $region50: #{tpu_custom_call.1} parent=0
    _
  %s11 = ssub.s32 1, %s9
  %s12 = scalar_select 0, %s11, %s9
  $region1: #{tpu_custom_call.1} parent=0
    #allocation2 [shape = 'u8[4096]{0}', space=vmem, size = 0x1000, scoped, tag = 'input window, operand 0, single buffered']
    #allocation3 [shape = 's32[1]{0}', space=sflag, size = 0x4, scoped, tag = 'scoped memory for tpu_custom_call.1']
    #allocation4 [shape = 's32[1]{0}', space=sflag, size = 0x4, scoped, tag = 'scoped memory for tpu_custom_call.1']
    #allocation5 [shape = 'u8[512]{0}', space=vmem, size = 0x400, scoped, tag = 'input window, operand 6, single buffered']
    #allocation6 [shape = 's32[1]{0}', space=sflag, size = 0x4, scoped, tag = 'scoped memory for tpu_custom_call.1']
    #allocation7 [shape = 'u8[4096]{0}', space=vmem, size = 0x1000, scoped, tag = 'output window, operand 0, single buffered']
    %13 = vsyncpa [#allocation3], 0
    %14 = vsyncpa [#allocation6], 0
    %15 = vsyncpa [#allocation4], 0
    // Predicated region
    $region2: #{tpu_custom_call.1} parent=1 // pred_check
      _
    $region3: #{tpu_custom_call.1} parent=1 // pred_check_branch
      %17 = sbr.rel (0) target = $region5
    $region4: #{tpu_custom_call.1} parent=1 // pred_region
      %s19 = ssub.s32 128, 128
      %20 = vsyncadd [#allocation3], %s19
      %s22 = sshll.u32 [#allocation2], 4
      %s23 = int_to_ptr.vmem [resolvable:$true] %s22
      %25 = dma.hbm_to_vmem [thread:$0]  %s0, 128, %s23, [#allocation3]
    $region5: #{tpu_custom_call.1} parent=1 // pred_fallthru
      _
    // Predicated region
    $region6: #{tpu_custom_call.1} parent=1 // pred_check
      _
    $region7: #{tpu_custom_call.1} parent=1 // pred_check_branch
      %27 = sbr.rel (0) target = $region9
    $region8: #{tpu_custom_call.1} parent=1 // pred_region
      _
    $region9: #{tpu_custom_call.1} parent=1 // pred_fallthru
      _
    // Predicated region
    $region10: #{tpu_custom_call.1} parent=1 // pred_check
      _
    $region11: #{tpu_custom_call.1} parent=1 // pred_check_branch
      %29 = sbr.rel (0) target = $region13
    $region12: #{tpu_custom_call.1} parent=1 // pred_region
      _
    $region13: #{tpu_custom_call.1} parent=1 // pred_fallthru
      _
    // Predicated region
    $region14: #{tpu_custom_call.1} parent=1 // pred_check
      _
    $region15: #{tpu_custom_call.1} parent=1 // pred_check_branch
      %31 = sbr.rel (0) target = $region17
    $region16: #{tpu_custom_call.1} parent=1 // pred_region
      _
    $region17: #{tpu_custom_call.1} parent=1 // pred_fallthru
      _
    // Predicated region
    $region18: #{tpu_custom_call.1} parent=1 // pred_check
      _
    $region19: #{tpu_custom_call.1} parent=1 // pred_check_branch
      %33 = sbr.rel (0) target = $region21
    $region20: #{tpu_custom_call.1} parent=1 // pred_region
      _
    $region21: #{tpu_custom_call.1} parent=1 // pred_fallthru
      _
    // Predicated region
    $region22: #{tpu_custom_call.1} parent=1 // pred_check
      _
    $region23: #{tpu_custom_call.1} parent=1 // pred_check_branch
      %35 = sbr.rel (0) target = $region25
    $region24: #{tpu_custom_call.1} parent=1 // pred_region
      _
    $region25: #{tpu_custom_call.1} parent=1 // pred_fallthru
      _
    // Predicated region
    $region26: #{tpu_custom_call.1} parent=1 // pred_check
      _
    $region27: #{tpu_custom_call.1} parent=1 // pred_check_branch
      %37 = sbr.rel (0) target = $region29
    $region28: #{tpu_custom_call.1} parent=1 // pred_region
      %s39 = ssub.s32 16, 16
      %40 = vsyncadd [#allocation6], %s39
      %s42 = sshll.u32 [#allocation5], 4
      %s43 = int_to_ptr.vmem [resolvable:$true] %s42
      %45 = dma.hbm_to_vmem [thread:$0]  %s6, 16, %s43, [#allocation6]
    $region29: #{tpu_custom_call.1} parent=1 // pred_fallthru
      _
    // Predicated region
    $region30: #{tpu_custom_call.1} parent=1 // pred_check
      _
    $region31: #{tpu_custom_call.1} parent=1 // pred_check_branch
      %47 = sbr.rel (0) target = $region33
    $region32: #{tpu_custom_call.1} parent=1 // pred_region
      _
    $region33: #{tpu_custom_call.1} parent=1 // pred_fallthru
      _
    // Predicated region
    $region34: #{tpu_custom_call.1} parent=1 // pred_check
      _
    $region35: #{tpu_custom_call.1} parent=1 // pred_check_branch
      %49 = sbr.rel (0) target = $region37
    $region36: #{tpu_custom_call.1} parent=1 // pred_region
      %50 = dma.done [#allocation3], 128
    $region37: #{tpu_custom_call.1} parent=1 // pred_fallthru
      _
    // Predicated region
    $region38: #{tpu_custom_call.1} parent=1 // pred_check
      _
    $region39: #{tpu_custom_call.1} parent=1 // pred_check_branch
      %52 = sbr.rel (0) target = $region41
    $region40: #{tpu_custom_call.1} parent=1 // pred_region
      %53 = dma.done [#allocation6], 16
    $region41: #{tpu_custom_call.1} parent=1 // pred_fallthru
      _
    %v54 = vld [vmem:[#allocation2] sm:$0xff]
    %v55 = vld [vmem:[%s1] sm:$0xff]
    %v56 = vld [vmem:[%s1 + $0x8] sm:$0xff]
    %v57 = vld [vmem:[%s2] sm:$0x1]
    %v59 = vlaneseq
    %v60 = vshrl.u32 %v59, 7
    %v61 = vsub.s32 0, %v60
    %v62 = vrot.slane %v57, %v61
    %vm64 = vcmask 130048
    %v66 = vsel %vm64, %v54, 0
    %68 = vmatprep.subr.mxu0 0.0
    %69 = vmatpush1.msra.mxu0 %v55
    %70 = vmatprep.subr.mxu0 0.0
    %71 = vmatpush1.msra.mxu0 %v56
    %72 = vmatprep.subr.mxu0 0.0
    %73 = vmatpush1.msra.mxu0 0.0
    %74 = vmatprep.subr.mxu0 0.0
    %75 = vmatpush1.msra.mxu0 0.0
    %76 = vmatprep.subr.mxu0 0.0
    %77 = vmatpush1.msra.mxu0 0.0
    %78 = vmatprep.subr.mxu0 0.0
    %79 = vmatpush1.msra.mxu0 0.0
    %80 = vmatprep.subr.mxu0 0.0
    %81 = vmatpush1.msra.mxu0 0.0
    %82 = vmatprep.subr.mxu0 0.0
    %83 = vmatpush1.msra.mxu0 0.0
    %84 = vmatprep.subr.mxu0 0.0
    %85 = vmatpush1.msra.mxu0 0.0
    %86 = vmatprep.subr.mxu0 0.0
    %87 = vmatpush1.msra.mxu0 0.0
    %88 = vmatprep.subr.mxu0 0.0
    %89 = vmatpush1.msra.mxu0 0.0
    %90 = vmatprep.subr.mxu0 0.0
    %91 = vmatpush1.msra.mxu0 0.0
    %92 = vmatprep.subr.mxu0 0.0
    %93 = vmatpush1.msra.mxu0 0.0
    %94 = vmatprep.subr.mxu0 0.0
    %95 = vmatpush1.msra.mxu0 0.0
    %96 = vmatprep.subr.mxu0 0.0
    %97 = vmatpush1.msra.mxu0 0.0
    %98 = vmatprep.subr.mxu0 0.0
    %99 = vmatpush1.msra.mxu0 0.0
    %100 = vmatprep.subr.mxu0 0.0
    %101 = vmatpush1.msra.mxu0 0.0
    %102 = vmatprep.subr.mxu0 0.0
    %103 = vmatpush1.msra.mxu0 0.0
    %104 = vmatprep.subr.mxu0 0.0
    %105 = vmatpush1.msra.mxu0 0.0
    %106 = vmatprep.subr.mxu0 0.0
    %107 = vmatpush1.msra.mxu0 0.0
    %108 = vmatprep.subr.mxu0 0.0
    %109 = vmatpush1.msra.mxu0 0.0
    %110 = vmatprep.subr.mxu0 0.0
    %111 = vmatpush1.msra.mxu0 0.0
    %112 = vmatprep.subr.mxu0 0.0
    %113 = vmatpush1.msra.mxu0 0.0
    %114 = vmatprep.subr.mxu0 0.0
    %115 = vmatpush1.msra.mxu0 0.0
    %116 = vmatprep.subr.mxu0 0.0
    %117 = vmatpush1.msra.mxu0 0.0
    %118 = vmatprep.subr.mxu0 0.0
    %119 = vmatpush1.msra.mxu0 0.0
    %120 = vmatprep.subr.mxu0 0.0
    %121 = vmatpush1.msra.mxu0 0.0
    %122 = vmatprep.subr.mxu0 0.0
    %123 = vmatpush1.msra.mxu0 0.0
    %124 = vmatprep.subr.mxu0 0.0
    %125 = vmatpush1.msra.mxu0 0.0
    %126 = vmatprep.subr.mxu0 0.0
    %127 = vmatpush1.msra.mxu0 0.0
    %128 = vmatprep.subr.mxu0 0.0
    %129 = vmatpush1.msra.mxu0 0.0
    %130 = vmatprep.subr.mxu0 0.0
    %131 = vmatpush1.msra.mxu0 0.0
    %132 = vmatprep.mubr.f32.mxu0 0.0
    %133 = vmatmul.mubr.f32.gmra.mrb[0].mxu0 %v66
    %v134 = vpop.f32.mrb[0].mxu0
    %v135 = vadd.f32 %v62, %v134
    %v136 = vpop.f32.mrb[0].mxu0
    %137 = vdwg.mxu0
    %vm138 = vcmp.ge.f32.partialorder %v135, 0.0
    %v139 = vmul.f32 %v135, 0.01
    %v140 = vsel %vm138, %v135, %v139
    %v141 = vld [vmem:[%s3] sm:$0xff]
    %v142 = vld [vmem:[%s3 + $0x8] sm:$0xff]
    %v143 = vld [vmem:[%s3 + $0x10] sm:$0xff]
    %v144 = vld [vmem:[%s3 + $0x18] sm:$0xff]
    %v145 = vld [vmem:[%s4] sm:$0x1]
    %v147 = vlaneseq
    %v148 = vshrl.u32 %v147, 7
    %v149 = vsub.s32 0, %v148
    %v150 = vrot.slane %v145, %v149
    %vm152 = vcmask 261120
    %v154 = vsel %vm152, %v140, 0
    %156 = vmatprep.subr.mxu0 0.0
    %157 = vmatpush1.msra.mxu0 %v141
    %158 = vmatprep.subr.mxu0 0.0
    %159 = vmatpush1.msra.mxu0 %v142
    %160 = vmatprep.subr.mxu0 0.0
    %161 = vmatpush1.msra.mxu0 %v143
    %162 = vmatprep.subr.mxu0 0.0
    %163 = vmatpush1.msra.mxu0 %v144
    %164 = vmatprep.subr.mxu0 0.0
    %165 = vmatpush1.msra.mxu0 0.0
    %166 = vmatprep.subr.mxu0 0.0
    %167 = vmatpush1.msra.mxu0 0.0
    %168 = vmatprep.subr.mxu0 0.0
    %169 = vmatpush1.msra.mxu0 0.0
    %170 = vmatprep.subr.mxu0 0.0
    %171 = vmatpush1.msra.mxu0 0.0
    %172 = vmatprep.subr.mxu0 0.0
    %173 = vmatpush1.msra.mxu0 0.0
    %174 = vmatprep.subr.mxu0 0.0
    %175 = vmatpush1.msra.mxu0 0.0
    %176 = vmatprep.subr.mxu0 0.0
    %177 = vmatpush1.msra.mxu0 0.0
    %178 = vmatprep.subr.mxu0 0.0
    %179 = vmatpush1.msra.mxu0 0.0
    %180 = vmatprep.subr.mxu0 0.0
    %181 = vmatpush1.msra.mxu0 0.0
    %182 = vmatprep.subr.mxu0 0.0
    %183 = vmatpush1.msra.mxu0 0.0
    %184 = vmatprep.subr.mxu0 0.0
    %185 = vmatpush1.msra.mxu0 0.0
    %186 = vmatprep.subr.mxu0 0.0
    %187 = vmatpush1.msra.mxu0 0.0
    %188 = vmatprep.subr.mxu0 0.0
    %189 = vmatpush1.msra.mxu0 0.0
    %190 = vmatprep.subr.mxu0 0.0
    %191 = vmatpush1.msra.mxu0 0.0
    %192 = vmatprep.subr.mxu0 0.0
    %193 = vmatpush1.msra.mxu0 0.0
    %194 = vmatprep.subr.mxu0 0.0
    %195 = vmatpush1.msra.mxu0 0.0
    %196 = vmatprep.subr.mxu0 0.0
    %197 = vmatpush1.msra.mxu0 0.0
    %198 = vmatprep.subr.mxu0 0.0
    %199 = vmatpush1.msra.mxu0 0.0
    %200 = vmatprep.subr.mxu0 0.0
    %201 = vmatpush1.msra.mxu0 0.0
    %202 = vmatprep.subr.mxu0 0.0
    %203 = vmatpush1.msra.mxu0 0.0
    %204 = vmatprep.subr.mxu0 0.0
    %205 = vmatpush1.msra.mxu0 0.0
    %206 = vmatprep.subr.mxu0 0.0
    %207 = vmatpush1.msra.mxu0 0.0
    %208 = vmatprep.subr.mxu0 0.0
    %209 = vmatpush1.msra.mxu0 0.0
    %210 = vmatprep.subr.mxu0 0.0
    %211 = vmatpush1.msra.mxu0 0.0
    %212 = vmatprep.subr.mxu0 0.0
    %213 = vmatpush1.msra.mxu0 0.0
    %214 = vmatprep.subr.mxu0 0.0
    %215 = vmatpush1.msra.mxu0 0.0
    %216 = vmatprep.subr.mxu0 0.0
    %217 = vmatpush1.msra.mxu0 0.0
    %218 = vmatprep.subr.mxu0 0.0
    %219 = vmatpush1.msra.mxu0 0.0
    %220 = vmatprep.mubr.f32.mxu0 0.0
    %221 = vmatmul.mubr.f32.gmra.mrb[0].mxu0 %v154
    %v222 = vpop.f32.mrb[0].mxu0
    %v223 = vadd.f32 %v150, %v222
    %v224 = vpop.f32.mrb[0].mxu0
    %225 = vdwg.mxu0
    %vm226 = vcmp.ge.f32.partialorder %v223, 0.0
    %v227 = vmul.f32 %v223, 0.01
    %v228 = vsel %vm226, %v223, %v227
    %v229 = vld [vmem:[%s5] sm:$0xff]
    %v230 = vld [vmem:[%s5 + $0x8] sm:$0xff]
    %v231 = vld [vmem:[%s5 + $0x10] sm:$0xff]
    %v232 = vld [vmem:[%s5 + $0x18] sm:$0xff]
    %v233 = vld [vmem:[#allocation5] sm:$0x1]
    %v235 = vlaneseq
    %v236 = vshrl.u32 %v235, 7
    %v237 = vsub.s32 0, %v236
    %v238 = vrot.slane %v233, %v237
    %v241 = vsel %vm152, %v228, 0
    %243 = vmatprep.subr.mxu0 0.0
    %244 = vmatpush1.msra.mxu0 %v229
    %245 = vmatprep.subr.mxu0 0.0
    %246 = vmatpush1.msra.mxu0 %v230
    %247 = vmatprep.subr.mxu0 0.0
    %248 = vmatpush1.msra.mxu0 %v231
    %249 = vmatprep.subr.mxu0 0.0
    %250 = vmatpush1.msra.mxu0 %v232
    %251 = vmatprep.subr.mxu0 0.0
    %252 = vmatpush1.msra.mxu0 0.0
    %253 = vmatprep.subr.mxu0 0.0
    %254 = vmatpush1.msra.mxu0 0.0
    %255 = vmatprep.subr.mxu0 0.0
    %256 = vmatpush1.msra.mxu0 0.0
    %257 = vmatprep.subr.mxu0 0.0
    %258 = vmatpush1.msra.mxu0 0.0
    %259 = vmatprep.subr.mxu0 0.0
    %260 = vmatpush1.msra.mxu0 0.0
    %261 = vmatprep.subr.mxu0 0.0
    %262 = vmatpush1.msra.mxu0 0.0
    %263 = vmatprep.subr.mxu0 0.0
    %264 = vmatpush1.msra.mxu0 0.0
    %265 = vmatprep.subr.mxu0 0.0
    %266 = vmatpush1.msra.mxu0 0.0
    %267 = vmatprep.subr.mxu0 0.0
    %268 = vmatpush1.msra.mxu0 0.0
    %269 = vmatprep.subr.mxu0 0.0
    %270 = vmatpush1.msra.mxu0 0.0
    %271 = vmatprep.subr.mxu0 0.0
    %272 = vmatpush1.msra.mxu0 0.0
    %273 = vmatprep.subr.mxu0 0.0
    %274 = vmatpush1.msra.mxu0 0.0
    %275 = vmatprep.subr.mxu0 0.0
    %276 = vmatpush1.msra.mxu0 0.0
    %277 = vmatprep.subr.mxu0 0.0
    %278 = vmatpush1.msra.mxu0 0.0
    %279 = vmatprep.subr.mxu0 0.0
    %280 = vmatpush1.msra.mxu0 0.0
    %281 = vmatprep.subr.mxu0 0.0
    %282 = vmatpush1.msra.mxu0 0.0
    %283 = vmatprep.subr.mxu0 0.0
    %284 = vmatpush1.msra.mxu0 0.0
    %285 = vmatprep.subr.mxu0 0.0
    %286 = vmatpush1.msra.mxu0 0.0
    %287 = vmatprep.subr.mxu0 0.0
    %288 = vmatpush1.msra.mxu0 0.0
    %289 = vmatprep.subr.mxu0 0.0
    %290 = vmatpush1.msra.mxu0 0.0
    %291 = vmatprep.subr.mxu0 0.0
    %292 = vmatpush1.msra.mxu0 0.0
    %293 = vmatprep.subr.mxu0 0.0
    %294 = vmatpush1.msra.mxu0 0.0
    %295 = vmatprep.subr.mxu0 0.0
    %296 = vmatpush1.msra.mxu0 0.0
    %297 = vmatprep.subr.mxu0 0.0
    %298 = vmatpush1.msra.mxu0 0.0
    %299 = vmatprep.subr.mxu0 0.0
    %300 = vmatpush1.msra.mxu0 0.0
    %301 = vmatprep.subr.mxu0 0.0
    %302 = vmatpush1.msra.mxu0 0.0
    %303 = vmatprep.subr.mxu0 0.0
    %304 = vmatpush1.msra.mxu0 0.0
    %305 = vmatprep.subr.mxu0 0.0
    %306 = vmatpush1.msra.mxu0 0.0
    %307 = vmatprep.mubr.f32.mxu0 0.0
    %308 = vmatmul.mubr.f32.gmra.mrb[0].mxu0 %v241
    %v309 = vpop.f32.mrb[0].mxu0
    %v310 = vadd.f32 %v238, %v309
    %v311 = vpop.f32.mrb[0].mxu0
    %312 = vdwg.mxu0
    %vm313 = vcmask 64512
    %v314 = vsel %vm313, %v310, -inf
    %315 = vmax.xlane.f32.xlu0 %v314
    %v316 = vpop.xlane.xlu0 %315
    %v317 = vsub.f32 %v310, %v316
    %v318 = vmul.f32 %v317, 1.442695
    %v319 = vpow.pop %v318
    %v320 = vsel %vm313, %v319, 0.0
    %321 = vadd.xlane.f32.xlu0 %v320
    %v322 = vpop.xlane.xlu0 %321
    %v323 = vlog2.pop %v322
    %v324 = vmul.f32 %v323, 0.6931472
    %v325 = vsub.f32 %v317, %v324
    %v326 = vld [vmem:[%s7] sm:$0xff]
    %v327 = vadd.f32 %v310, %v326
    %v328 = vsel %vm313, %v327, -inf
    %329 = vmax.xlane.f32.xlu0 %v328
    %v330 = vpop.xlane.xlu0 %329
    %v331 = vlaneseq
    %v332 = vand.u32 %v331, 127
    %vm333 = vcmp.ge.f32.partialorder %v327, %v330
    %v334 = vsel %vm333, %v332, 8
    %v335 = vsel %vm313, %v334, 2147483647
    %v336 = vand.u32 %v335, 65535
    %v337 = vshra.s32 %v335, 16
    %v338 = vcvt.s32.f32 %v336
    %v339 = vcvt.s32.f32 %v337
    %340 = vmin.xlane.f32.xlu0 %v339
    %v341 = vpop.xlane.xlu0 %340
    %vm342 = vcmp.eq.f32.partialorder %v339, %v341
    %v343 = vsel %vm342, %v338, inf
    %344 = vmin.xlane.f32.xlu0 %v343
    %v345 = vpop.xlane.xlu0 %344
    %v346 = vcvt.f32.s32 %v345
    %v347 = vcvt.f32.s32 %v341
    %v348 = vshll.u32 %v347, 16
    %v349 = vadd.s32 %v348, %v346
    %vm350 = vcmp.eq.s32.totalorder %v332, %v349
    %v351 = vsel %vm350, %v325, 0.0
    %v352 = vsel %vm313, %v351, 0.0
    %353 = vadd.xlane.f32.xlu0 %v352
    %v354 = vpop.xlane.xlu0 %353
    %v355 = vmul.f32 %v310, %v310
    %v356 = vsel %vm313, %v355, 0.0
    %357 = vadd.xlane.f32.xlu0 %v356
    %v358 = vpop.xlane.xlu0 %357
    %v359 = vsel %vm350, 1, 0
    %v360 = vcvt.s32.f32 %v359
    %vm361 = vcmp.eq.s32.totalorder %v332, 8
    %v362 = vsel %vm361, %v354, %v360
    %vm363 = vcmp.eq.s32.totalorder %v332, 9
    %v364 = vsel %vm363, %v358, %v362
    %365 = vst [vmem:[#allocation7] sm:$0xff] %v364
    // Predicated region
    $region42: #{tpu_custom_call.1} parent=1 // pred_check
      _
    $region43: #{tpu_custom_call.1} parent=1 // pred_check_branch
      %367 = sbr.rel (0) target = $region45
    $region44: #{tpu_custom_call.1} parent=1 // pred_region
      %s369 = ssub.s32 128, 128
      %370 = vsyncadd [#allocation4], %s369
      %s372 = sshll.u32 [#allocation7], 4
      %s373 = int_to_ptr.vmem [resolvable:$true] %s372
      %375 = dma.vmem_to_hbm [thread:$0]  %s373, 128, %s8, [#allocation4]
    $region45: #{tpu_custom_call.1} parent=1 // pred_fallthru
      _
    // Predicated region
    $region46: #{tpu_custom_call.1} parent=1 // pred_check
      _
    $region47: #{tpu_custom_call.1} parent=1 // pred_check_branch
      %377 = sbr.rel (0) target = $region49
    $region48: #{tpu_custom_call.1} parent=1 // pred_region
      %378 = dma.done [#allocation4], 128
    $region49: #{tpu_custom_call.1} parent=1 // pred_fallthru
      _
    %379 = vsyncpa [#allocation3], 1
    %380 = vsyncpa [#allocation6], 1
    %381 = vsyncpa [#allocation4], 1

</llo_original>
